<compile_context>
chip_gen: v7x
topology: tpu7x:2x2x1
jax: 0.10.0
libtpu: 0.0.40
codegen_flags: <defaults>
</compile_context>

<pallas_src>
import functools

import jax
import jax.numpy as jnp
from jax.experimental import pallas as pl
from jax.experimental.pallas import tpu as pltpu


def _round_up(x, m):
    return (x + m - 1) // m * m


def _tpu_vmem_bytes():
    """Physical per-core VMEM; conservative fallback (v7x per-TC) if the query fails."""
    try:
        info = pltpu.get_tpu_info()
        v = int(getattr(info, "vmem_capacity_bytes", 0))
        if v > 0:
            return v
    except Exception:
        pass
    return 64 << 20


# ---------------------------------------------------------------------------
# Pallas kernel: one (G, C, H*W) slab of the batch per grid step.
# ---------------------------------------------------------------------------
def _se_weight_kernel(x_ref, w1_ref, b1_ref, w2_ref, b2_ref, o_ref, *, inv_hw):
    # Global average pool over the spatial (lane) axis; f32 accumulation without
    # materializing a full f32 copy of the slab.
    pooled = jnp.sum(x_ref[...], axis=-1, dtype=jnp.float32) * inv_hw      # (G, C)

    # fc1 (1x1 conv == channel matmul, hidden padded to 128 lanes) + ReLU
    h = jnp.dot(pooled, w1_ref[...],
                preferred_element_type=jnp.float32) + b1_ref[...]          # (G, Hpad)
    h = jnp.maximum(h, 0.0)

    # fc2 (1x1 conv == channel matmul) + sigmoid
    o = jnp.dot(h, w2_ref[...],
                preferred_element_type=jnp.float32) + b2_ref[...]          # (G, C)
    o_ref[...] = jax.nn.sigmoid(o).astype(o_ref.dtype)


# ---------------------------------------------------------------------------
# Batch-block picker: VMEM-budget aware, lane/sublane padding aware.
# ---------------------------------------------------------------------------
def _pick_batch_block(B, C, hw, itemsize, slab_budget_bytes):
    hw_pad = _round_up(hw, 128)           # lane padding of the spatial axis
    c_pad = _round_up(C, 8)               # sublane padding of the channel axis
    row_bytes = c_pad * hw_pad * itemsize
    # The double-buffered x slab is the dominant VMEM consumer.
    max_rows = max(1, slab_budget_bytes // (2 * row_bytes))
    block = min(B, int(max_rows))
    if B >= 2:
        block = min(block, B // 2)        # guarantee >= 2 grid steps
    block = max(block, 1)
    divisors = [d for d in range(1, B + 1) if B % d == 0 and d <= block]
    mult8 = [d for d in divisors if d % 8 == 0]
    return (mult8 or divisors)[-1]


# ---------------------------------------------------------------------------
# Wrapper.
# ---------------------------------------------------------------------------
def se_weight_module(x, params, *, block_b=None):
    """x: (B, C, H, W) array (any float dtype); params from SEWeightModule."""
    B, C, H, W = x.shape
    hw = H * W
    hidden = params["fc1_w"].shape[0]                 # C // reduction
    itemsize = jnp.dtype(x.dtype).itemsize

    vmem = _tpu_vmem_bytes()
    # ~40% of physical VMEM for the double-buffered x slab; the rest is headroom
    # for resident weights, the output block, and compiler scratch.  This is
    # naturally half as large on v7x (64 MiB) as on v5e/v6e (128 MiB).
    slab_budget = int(vmem * 0.40)
    vmem_limit = min(int(vmem * 0.85), 100 << 20)

    if block_b is None:
        block_b = _pick_batch_block(B, C, hw, itemsize, slab_budget)
    assert B % block_b == 0, "batch must be divisible by the batch block"

    # Lane-dense layout: spatial on the lane axis.
    x3 = x.reshape(B, C, hw)

    # Conv2d(.., kernel_size=1) weights -> matmul layout, f32 residents,
    # hidden dim zero-padded up to 128 so the fc1 output tile is lane-dense.
    hidden_pad = _round_up(hidden, 128)
    w1 = params["fc1_w"].reshape(hidden, C).T.astype(jnp.float32)   # (C, hidden)
    w2 = params["fc2_w"].reshape(C, hidden).T.astype(jnp.float32)   # (hidden, C)
    b1 = params["fc1_b"].astype(jnp.float32)[None, :]               # (1, hidden)
    b2 = params["fc2_b"].astype(jnp.float32)[None, :]               # (1, C)
    if hidden_pad != hidden:
        w1 = jnp.pad(w1, ((0, 0), (0, hidden_pad - hidden)))
        b1 = jnp.pad(b1, ((0, 0), (0, hidden_pad - hidden)))
        w2 = jnp.pad(w2, ((0, hidden_pad - hidden), (0, 0)))        # zero rows: no effect

    kernel = functools.partial(_se_weight_kernel, inv_hw=1.0 / float(hw))

    cost = pl.CostEstimate(
        flops=2 * B * C * hidden_pad * 2 + B * C * hw,
        transcendentals=B * C,
        bytes_accessed=B * C * hw * itemsize
        + (2 * C * hidden_pad + hidden_pad + C) * 4
        + B * C * itemsize,
    )

    out2d = pl.pallas_call(
        kernel,
        out_shape=jax.ShapeDtypeStruct((B, C), x.dtype),
        grid_spec=pltpu.PrefetchScalarGridSpec(
            num_scalar_prefetch=0,
            grid=(B // block_b,),
            in_specs=[
                pl.BlockSpec((block_b, C, hw), lambda i: (i, 0, 0)),   # x slab
                pl.BlockSpec((C, hidden_pad), lambda i: (0, 0)),       # w1 (resident)
                pl.BlockSpec((1, hidden_pad), lambda i: (0, 0)),       # b1
                pl.BlockSpec((hidden_pad, C), lambda i: (0, 0)),       # w2 (resident)
                pl.BlockSpec((1, C), lambda i: (0, 0)),                # b2
            ],
            out_specs=pl.BlockSpec((block_b, C), lambda i: (i, 0)),
        ),
        compiler_params=pltpu.CompilerParams(
            dimension_semantics=("parallel",),
            vmem_limit_bytes=vmem_limit,
        ),
        cost_estimate=cost,
    )(x3, w1, b1, w2, b2)

    # Match the PyTorch output shape (B, C, 1, 1).
    return out2d.reshape(B, C, 1, 1)


# ---------------------------------------------------------------------------
# Pure-JAX reference (mirrors the PyTorch forward exactly).
# ---------------------------------------------------------------------------
def reference(x, params):
    B, C, H, W = x.shape
    hidden = params["fc1_w"].shape[0]
    pooled = jnp.mean(x.astype(jnp.float32), axis=(2, 3))               # (B, C)
    h = pooled @ params["fc1_w"].reshape(hidden, C).T + params["fc1_b"]
    h = jnp.maximum(h, 0.0)
    o = h @ params["fc2_w"].reshape(C, hidden).T + params["fc2_b"]
    return jax.nn.sigmoid(o).astype(x.dtype).reshape(B, C, 1, 1)


# ---------------------------------------------------------------------------
if __name__ == "__main__":
    # Small shapes consistent with the module (reduction=16 => channels >= 16).
    B, C, H, W = 16, 64, 16, 16
    reduction = 16
    hidden = C // reduction

    key = jax.random.PRNGKey(0)
    k0, k1, k2, k3, k4 = jax.random.split(key, 5)

    params = {
        # Conv2d(C, C//r, 1): weight (C//r, C, 1, 1), bias (C//r,)
        "fc1_w": jax.random.normal(k0, (hidden, C, 1, 1), jnp.float32) * 0.1,
        "fc1_b": jax.random.normal(k1, (hidden,), jnp.float32) * 0.01,
        # Conv2d(C//r, C, 1): weight (C, C//r, 1, 1), bias (C,)
        "fc2_w": jax.random.normal(k2, (C, hidden, 1, 1), jnp.float32) * 0.1,
        "fc2_b": jax.random.normal(k3, (C,), jnp.float32) * 0.01,
    }

    # f32 path (matches PyTorch defaults / tight tolerance).
    x = jax.random.normal(k4, (B, C, H, W), jnp.float32)
    out = jax.block_until_ready(se_weight_module(x, params))
    ref = reference(x, params)
    assert out.shape == (B, C, 1, 1), out.shape
    max_err = float(jnp.max(jnp.abs(out - ref)))
    assert jnp.allclose(out, ref, atol=1e-5, rtol=1e-5), max_err

    # bf16 path (HBM-bandwidth win; looser tolerance is a test artifact only).
    x_bf16 = x.astype(jnp.bfloat16)
    out_bf16 = jax.block_until_ready(se_weight_module(x_bf16, params))
    ref_bf16 = reference(x_bf16, params)
    assert out_bf16.shape == (B, C, 1, 1)
    assert jnp.allclose(out_bf16.astype(jnp.float32),
                        ref_bf16.astype(jnp.float32), atol=2e-2, rtol=2e-2)

    print("KERNEL_OK")
</pallas_src>

<mosaic_0001>
module attributes {stable_mosaic.version = 11 : i64} {
  func.func @_se_weight_kernel(%arg0: i32, %arg1: memref<8x64x256xf32, #tpu.memory_space<vmem>>, %arg2: memref<64x128xf32, #tpu.memory_space<vmem>>, %arg3: memref<1x128xf32, #tpu.memory_space<vmem>>, %arg4: memref<128x64xf32, #tpu.memory_space<vmem>>, %arg5: memref<1x64xf32, #tpu.memory_space<vmem>>, %arg6: memref<8x64xf32, #tpu.memory_space<vmem>>) attributes {dimension_semantics = [#tpu.dimension_semantics<parallel>], iteration_bounds = array<i64: 2>, scalar_prefetch = 0 : i64, scratch_operands = 0 : i64, tpu.core_type = #tpu.core_type<tc>, window_params = [{transform_indices = @transform_0, window_bounds = array<i64: 8, 64, 256>}, {pipeline_mode = #tpu.pipeline_mode<synchronous>, transform_indices = @transform_1, window_bounds = array<i64: 64, 128>}, {pipeline_mode = #tpu.pipeline_mode<synchronous>, transform_indices = @transform_2, window_bounds = array<i64: 1, 128>}, {pipeline_mode = #tpu.pipeline_mode<synchronous>, transform_indices = @transform_3, window_bounds = array<i64: 128, 64>}, {pipeline_mode = #tpu.pipeline_mode<synchronous>, transform_indices = @transform_4, window_bounds = array<i64: 1, 64>}, {transform_indices = @transform_5, window_bounds = array<i64: 8, 64>}]} {
    %c0 = arith.constant 0 : index
    %c0_0 = arith.constant 0 : index
    %c0_1 = arith.constant 0 : index
    %0 = vector.load %arg1[%c0, %c0_0, %c0_1] : memref<8x64x256xf32, #tpu.memory_space<vmem>>, vector<8x64x256xf32>
    %cst = arith.constant dense<0.000000e+00> : vector<8x64xf32>
    %1 = vector.multi_reduction <add>, %0, %cst [2] : vector<8x64x256xf32> to vector<8x64xf32>
    %cst_2 = arith.constant 3.906250e-03 : f32
    %2 = vector.broadcast %cst_2 : f32 to vector<8x64xf32>
    %3 = arith.mulf %1, %2 : vector<8x64xf32>
    %c0_3 = arith.constant 0 : index
    %c0_4 = arith.constant 0 : index
    %4 = vector.load %arg2[%c0_3, %c0_4] : memref<64x128xf32, #tpu.memory_space<vmem>>, vector<64x128xf32>
    %cst_5 = arith.constant dense<0.000000e+00> : vector<8x128xf32>
    %5 = tpu.matmul %3, %4, %cst_5 {dimension_numbers = #tpu.dot_dimension_numbers<[1], [0], [0], [1], [0, 0, 1, 1], [], []>} : vector<8x64xf32>, vector<64x128xf32>, vector<8x128xf32> -> vector<8x128xf32>
    %c0_6 = arith.constant 0 : index
    %c0_7 = arith.constant 0 : index
    %6 = vector.load %arg3[%c0_6, %c0_7] : memref<1x128xf32, #tpu.memory_space<vmem>>, vector<1x128xf32>
    %7 = vector.broadcast %6 : vector<1x128xf32> to vector<8x128xf32>
    %8 = arith.addf %5, %7 : vector<8x128xf32>
    %cst_8 = arith.constant 0.000000e+00 : f32
    %9 = vector.broadcast %cst_8 : f32 to vector<8x128xf32>
    %10 = arith.maximumf %8, %9 : vector<8x128xf32>
    %c0_9 = arith.constant 0 : index
    %c0_10 = arith.constant 0 : index
    %11 = vector.load %arg4[%c0_9, %c0_10] : memref<128x64xf32, #tpu.memory_space<vmem>>, vector<128x64xf32>
    %cst_11 = arith.constant dense<0.000000e+00> : vector<8x64xf32>
    %12 = tpu.matmul %10, %11, %cst_11 {dimension_numbers = #tpu.dot_dimension_numbers<[1], [0], [0], [1], [0, 0, 1, 1], [], []>} : vector<8x128xf32>, vector<128x64xf32>, vector<8x64xf32> -> vector<8x64xf32>
    %c0_12 = arith.constant 0 : index
    %c0_13 = arith.constant 0 : index
    %13 = vector.load %arg5[%c0_12, %c0_13] : memref<1x64xf32, #tpu.memory_space<vmem>>, vector<1x64xf32>
    %14 = vector.broadcast %13 : vector<1x64xf32> to vector<8x64xf32>
    %15 = arith.addf %12, %14 : vector<8x64xf32>
    %16 = arith.negf %15 : vector<8x64xf32>
    %17 = math.exp %16 : vector<8x64xf32>
    %cst_14 = arith.constant 1.000000e+00 : f32
    %18 = vector.broadcast %cst_14 : f32 to vector<8x64xf32>
    %19 = arith.addf %18, %17 : vector<8x64xf32>
    %20 = arith.divf %18, %19 : vector<8x64xf32>
    %c0_15 = arith.constant 0 : index
    %c0_16 = arith.constant 0 : index
    %21 = vector.load %arg6[%c0_15, %c0_16] : memref<8x64xf32, #tpu.memory_space<vmem>>, vector<8x64xf32>
    tpu.vector_store %arg6[%c0_15, %c0_16], %20 {strides = array<i32>} : memref<8x64xf32, #tpu.memory_space<vmem>>, vector<8x64xf32>,
    return
  }
  func.func @transform_0(%arg0: i32) -> (i32, i32, i32) {
    %c0_i32 = arith.constant 0 : i32
    %c0_i32_0 = arith.constant 0 : i32
    %c0_i32_1 = arith.constant 0 : i32
    return %arg0, %c0_i32, %c0_i32_0 : i32, i32, i32
  }
  func.func @transform_1(%arg0: i32) -> (i32, i32) {
    %c0_i32 = arith.constant 0 : i32
    %c0_i32_0 = arith.constant 0 : i32
    %c0_i32_1 = arith.constant 0 : i32
    return %c0_i32, %c0_i32_0 : i32, i32
  }
  func.func @transform_2(%arg0: i32) -> (i32, i32) {
    %c0_i32 = arith.constant 0 : i32
    %c0_i32_0 = arith.constant 0 : i32
    %c0_i32_1 = arith.constant 0 : i32
    return %c0_i32, %c0_i32_0 : i32, i32
  }
  func.func @transform_3(%arg0: i32) -> (i32, i32) {
    %c0_i32 = arith.constant 0 : i32
    %c0_i32_0 = arith.constant 0 : i32
    %c0_i32_1 = arith.constant 0 : i32
    return %c0_i32, %c0_i32_0 : i32, i32
  }
  func.func @transform_4(%arg0: i32) -> (i32, i32) {
    %c0_i32 = arith.constant 0 : i32
    %c0_i32_0 = arith.constant 0 : i32
    %c0_i32_1 = arith.constant 0 : i32
    return %c0_i32, %c0_i32_0 : i32, i32
  }
  func.func @transform_5(%arg0: i32) -> (i32, i32) {
    %c0_i32 = arith.constant 0 : i32
    %c0_i32_0 = arith.constant 0 : i32
    return %arg0, %c0_i32 : i32, i32
  }
}

</mosaic_0001>

<llo_original>
// kernel: tpu_custom_call.1
$region0: #{tpu_custom_call.1}
  #allocation0 [shape = 'u32[]', space=smem, size = 0x4, offset = 0x4, fixed_abs, tag = 'smem constant byte address 0x4 - core index']
  #allocation1 [shape = 'u32[144,128]{1,0:T(1,128)}', space=vmem, size = 0x12000, scoped, tag = 'internal scratch']
  %s0 = inlined_call_operand.hbm [shape: f32[16,64,256], index: 0, kind: input, shape index: {}]
  %s1 = inlined_call_operand.vmem [shape: f32[64,128], index: 1, kind: input, shape index: {}]
  %s2 = inlined_call_operand.vmem [shape: f32[1,128], index: 2, kind: input, shape index: {}]
  %s3 = inlined_call_operand.vmem [shape: f32[128,64], index: 3, kind: input, shape index: {}]
  %s4 = inlined_call_operand.vmem [shape: f32[1,64], index: 4, kind: input, shape index: {}]
  %s5 = inlined_call_operand.hbm [shape: f32[16,64], index: 5, kind: output, shape index: {}]
  %s6 = sld [smem:[#allocation0]]
  $region57: #{tpu_custom_call.1} parent=0
    _
  %s8 = ssub.s32 1, %s6
  %s9 = scalar_select 0, %s8, %s6
  $region1: #{tpu_custom_call.1} parent=0
    #allocation2 [shape = 'u8[1048576]{0}', space=vmem, size = 0x100000, scoped, tag = 'input window, operand 0']
    #allocation3 [shape = 's32[2]{0}', space=sflag, size = 0x8, scoped, tag = 'scoped memory for tpu_custom_call.1']
    #allocation4 [shape = 's32[2]{0}', space=sflag, size = 0x8, scoped, tag = 'scoped memory for tpu_custom_call.1']
    #allocation5 [shape = 'u8[8192]{0}', space=vmem, size = 0x2000, scoped, tag = 'output window, operand 0']
    %10 = vsyncpa [#allocation3], 0
    %s11 = scalar_lea.sflag [#allocation3], 1
    %12 = vsyncpa %s11, 0
    %13 = vsyncpa [#allocation4], 0
    %s14 = scalar_lea.sflag [#allocation4], 1
    %15 = vsyncpa %s14, 0
    loop: start=0, step=1, limit=4
    $region2: #{tpu_custom_call.1} parent=1 // loop_pre_header
      _
    $region3: #{tpu_custom_call.1} parent=1 // loop_header
      %s17 = sphi 0, %s21
      %p18 = scmp.ge.s32.totalorder %s17, 4
      %s27 = sphi 0, %s29
      %s30 = sphi 0, %s27
      %s31 = sphi 0, %s30
      %s47 = sphi 0, %s31
      %s51 = sphi 0, %s51
      %s53 = sphi 0, %s51
      %s54 = sphi 0, %s53
      %s68 = sphi 0, %s54
      %s72 = sphi 0, %s72
      %s74 = sphi 0, %s72
      %s75 = sphi 0, %s74
      %s89 = sphi 0, %s75
      %s93 = sphi 0, %s93
      %s95 = sphi 0, %s93
      %s96 = sphi 0, %s95
      %s110 = sphi 0, %s96
      %s114 = sphi 0, %s114
      %s116 = sphi 0, %s114
      %s117 = sphi 0, %s116
      %s131 = sphi 0, %s117
      %s137 = sphi 0, %s139
      %s140 = sphi 0, %s137
      %s141 = sphi 0, %s140
      %s157 = sphi 0, %s141
    $region4: #{tpu_custom_call.1} parent=1 // loop_header_branch
      %20 = sbr.rel (%p18) target = $region8
    $region5: #{tpu_custom_call.1} parent=1 // loop_body
      %s22 = ssub.s32 %s17, 1
      %s23 = ssub.s32 %s17, 2
      %s24 = sadd.s32 %s17, 1
      %s25 = ssub.s32 %s17, %s24
      %p26 = scmp.eq.s32.totalorder %s25, 0
      %s28 = sadd.s32 %s27, 1
      %s29 = scalar_select %p26, %s27, %s28
      %p32 = pneg %p26
      %p33 = scmp.eq.s32.totalorder %s17, 1
      %p34 = por %p32, %p33
      %p35 = scmp.ne.s32.totalorder %s27, %s30
      %p36 = scmp.eq.s32.totalorder %s17, 0
      %p37 = por %p35, %p36
      %p38 = scmp.ne.s32.totalorder %s27, %s30
      %p39 = scmp.eq.s32.totalorder %s22, 1
      %p40 = por %p38, %p39
      %p41 = scmp.ne.s32.totalorder %s30, %s31
      %p42 = scmp.eq.s32.totalorder %s22, 0
      %p43 = por %p41, %p42
      %p44 = scmp.ne.s32.totalorder %s30, %s31
      %p45 = scmp.eq.s32.totalorder %s23, 1
      %p46 = por %p44, %p45
      %p48 = scmp.ne.s32.totalorder %s31, %s47
      %p49 = scmp.eq.s32.totalorder %s23, 0
      %p50 = por %p48, %p49
      %s52 = sadd.s32 %s51, 1
      %p55 = scmp.eq.s32.totalorder %s17, 1
      %p56 = scmp.ne.s32.totalorder %s51, %s53
      %p57 = scmp.eq.s32.totalorder %s17, 0
      %p58 = por %p56, %p57
      %p59 = scmp.ne.s32.totalorder %s51, %s53
      %p60 = scmp.eq.s32.totalorder %s22, 1
      %p61 = por %p59, %p60
      %p62 = scmp.ne.s32.totalorder %s53, %s54
      %p63 = scmp.eq.s32.totalorder %s22, 0
      %p64 = por %p62, %p63
      %p65 = scmp.ne.s32.totalorder %s53, %s54
      %p66 = scmp.eq.s32.totalorder %s23, 1
      %p67 = por %p65, %p66
      %p69 = scmp.ne.s32.totalorder %s54, %s68
      %p70 = scmp.eq.s32.totalorder %s23, 0
      %p71 = por %p69, %p70
      %s73 = sadd.s32 %s72, 1
      %p76 = scmp.eq.s32.totalorder %s17, 1
      %p77 = scmp.ne.s32.totalorder %s72, %s74
      %p78 = scmp.eq.s32.totalorder %s17, 0
      %p79 = por %p77, %p78
      %p80 = scmp.ne.s32.totalorder %s72, %s74
      %p81 = scmp.eq.s32.totalorder %s22, 1
      %p82 = por %p80, %p81
      %p83 = scmp.ne.s32.totalorder %s74, %s75
      %p84 = scmp.eq.s32.totalorder %s22, 0
      %p85 = por %p83, %p84
      %p86 = scmp.ne.s32.totalorder %s74, %s75
      %p87 = scmp.eq.s32.totalorder %s23, 1
      %p88 = por %p86, %p87
      %p90 = scmp.ne.s32.totalorder %s75, %s89
      %p91 = scmp.eq.s32.totalorder %s23, 0
      %p92 = por %p90, %p91
      %s94 = sadd.s32 %s93, 1
      %p97 = scmp.eq.s32.totalorder %s17, 1
      %p98 = scmp.ne.s32.totalorder %s93, %s95
      %p99 = scmp.eq.s32.totalorder %s17, 0
      %p100 = por %p98, %p99
      %p101 = scmp.ne.s32.totalorder %s93, %s95
      %p102 = scmp.eq.s32.totalorder %s22, 1
      %p103 = por %p101, %p102
      %p104 = scmp.ne.s32.totalorder %s95, %s96
      %p105 = scmp.eq.s32.totalorder %s22, 0
      %p106 = por %p104, %p105
      %p107 = scmp.ne.s32.totalorder %s95, %s96
      %p108 = scmp.eq.s32.totalorder %s23, 1
      %p109 = por %p107, %p108
      %p111 = scmp.ne.s32.totalorder %s96, %s110
      %p112 = scmp.eq.s32.totalorder %s23, 0
      %p113 = por %p111, %p112
      %s115 = sadd.s32 %s114, 1
      %p118 = scmp.eq.s32.totalorder %s17, 1
      %p119 = scmp.ne.s32.totalorder %s114, %s116
      %p120 = scmp.eq.s32.totalorder %s17, 0
      %p121 = por %p119, %p120
      %p122 = scmp.ne.s32.totalorder %s114, %s116
      %p123 = scmp.eq.s32.totalorder %s22, 1
      %p124 = por %p122, %p123
      %p125 = scmp.ne.s32.totalorder %s116, %s117
      %p126 = scmp.eq.s32.totalorder %s22, 0
      %p127 = por %p125, %p126
      %p128 = scmp.ne.s32.totalorder %s116, %s117
      %p129 = scmp.eq.s32.totalorder %s23, 1
      %p130 = por %p128, %p129
      %p132 = scmp.ne.s32.totalorder %s117, %s131
      %p133 = scmp.eq.s32.totalorder %s23, 0
      %p134 = por %p132, %p133
      %s135 = ssub.s32 %s17, %s24
      %p136 = scmp.eq.s32.totalorder %s135, 0
      %s138 = sadd.s32 %s137, 1
      %s139 = scalar_select %p136, %s137, %s138
      %p142 = pneg %p136
      %p143 = scmp.eq.s32.totalorder %s17, 1
      %p144 = por %p142, %p143
      %p145 = scmp.ne.s32.totalorder %s137, %s140
      %p146 = scmp.eq.s32.totalorder %s17, 0
      %p147 = por %p145, %p146
      %p148 = scmp.ne.s32.totalorder %s137, %s140
      %p149 = scmp.eq.s32.totalorder %s22, 1
      %p150 = por %p148, %p149
      %p151 = scmp.ne.s32.totalorder %s140, %s141
      %p152 = scmp.eq.s32.totalorder %s22, 0
      %p153 = por %p151, %p152
      %p154 = scmp.ne.s32.totalorder %s140, %s141
      %p155 = scmp.eq.s32.totalorder %s23, 1
      %p156 = por %p154, %p155
      %p158 = scmp.ne.s32.totalorder %s141, %s157
      %p159 = scmp.eq.s32.totalorder %s23, 0
      %p160 = por %p158, %p159
      %p161 = scmp.le.s32.totalorder 1, %s17
      %p162 = scmp.lt.s32.totalorder %s17, 3
      %p163 = pnand %p161, %p162
      %p164 = pneg %p163
      // Predicated region
      $region9: #{tpu_custom_call.1} parent=5 // pred_check
        _
      $region10: #{tpu_custom_call.1} parent=5 // pred_check_branch
        %166 = sbr.rel (%p163) target = $region12
      $region11: #{tpu_custom_call.1} parent=5 // pred_region
        %s167 = ssub.s32 %s17, 1
        // Predicated region
        $region13: #{tpu_custom_call.1} parent=11 // pred_check
          %p168 = pneg %p64
        $region14: #{tpu_custom_call.1} parent=11 // pred_check_branch
          %170 = sbr.rel (%p168) target = $region16
        $region15: #{tpu_custom_call.1} parent=11 // pred_region
          _
        $region16: #{tpu_custom_call.1} parent=11 // pred_fallthru
          _
        // Predicated region
        $region17: #{tpu_custom_call.1} parent=11 // pred_check
          %p171 = pneg %p85
        $region18: #{tpu_custom_call.1} parent=11 // pred_check_branch
          %173 = sbr.rel (%p171) target = $region20
        $region19: #{tpu_custom_call.1} parent=11 // pred_region
          _
        $region20: #{tpu_custom_call.1} parent=11 // pred_fallthru
          _
        // Predicated region
        $region21: #{tpu_custom_call.1} parent=11 // pred_check
          %p174 = pneg %p106
        $region22: #{tpu_custom_call.1} parent=11 // pred_check_branch
          %176 = sbr.rel (%p174) target = $region24
        $region23: #{tpu_custom_call.1} parent=11 // pred_region
          _
        $region24: #{tpu_custom_call.1} parent=11 // pred_fallthru
          _
        // Predicated region
        $region25: #{tpu_custom_call.1} parent=11 // pred_check
          %p177 = pneg %p127
        $region26: #{tpu_custom_call.1} parent=11 // pred_check_branch
          %179 = sbr.rel (%p177) target = $region28
        $region27: #{tpu_custom_call.1} parent=11 // pred_region
          _
        $region28: #{tpu_custom_call.1} parent=11 // pred_fallthru
          _
      $region12: #{tpu_custom_call.1} parent=5 // pred_fallthru
        _
      %p180 = scmp.lt.s32.totalorder %s17, 2
      // Predicated region
      $region29: #{tpu_custom_call.1} parent=5 // pred_check
        %p181 = pneg %p180
      $region30: #{tpu_custom_call.1} parent=5 // pred_check_branch
        %183 = sbr.rel (%p181) target = $region32
      $region31: #{tpu_custom_call.1} parent=5 // pred_region
        // Predicated region
        $region33: #{tpu_custom_call.1} parent=31 // pred_check
          %p184 = pneg %p37
        $region34: #{tpu_custom_call.1} parent=31 // pred_check_branch
          %186 = sbr.rel (%p184) target = $region36
        $region35: #{tpu_custom_call.1} parent=31 // pred_region
          %s187 = sand.u32 %s27, 1
          %s188 = scalar_lea.sflag [#allocation3], %s187
          %s189 = sand.u32 %s27, 1
          %s190 = smul.addr %s189, 1024
          %s191 = scalar_lea.vmem [#allocation2], %s190
          %s192 = smul.u32 8, %s17
          %s194 = ssub.s32 16384, 16384
          %195 = vsyncadd %s188, %s194
          %s196 = smul.addr %s192, 16
          %s197 = smul.addr %s196, 128
          %s198 = scalar_lea.hbm %s0, %s197
          %s199 = sshll.u32 %s191, 4
          %s200 = int_to_ptr.vmem [resolvable:$true] %s199
          %205 = dma.hbm_to_vmem [thread:$0]  %s198, 16384, %s200, %s188, 256, 256, 16
        $region36: #{tpu_custom_call.1} parent=31 // pred_fallthru
          _
      $region32: #{tpu_custom_call.1} parent=5 // pred_fallthru
        _
      %p206 = scmp.le.s32.totalorder 1, %s17
      %p207 = scmp.lt.s32.totalorder %s17, 3
      %p208 = pnand %p206, %p207
      %p209 = pneg %p208
      // Predicated region
      $region37: #{tpu_custom_call.1} parent=5 // pred_check
        _
      $region38: #{tpu_custom_call.1} parent=5 // pred_check_branch
        %211 = sbr.rel (%p208) target = $region40
      $region39: #{tpu_custom_call.1} parent=5 // pred_region
        %s212 = ssub.s32 %s17, 1
        %s213 = sand.u32 %s30, 1
        %s214 = scalar_lea.sflag [#allocation3], %s213
        %s215 = sand.u32 %s30, 1
        %s216 = smul.addr %s215, 1024
        %s217 = scalar_lea.vmem [#allocation2], %s216
        // Predicated region
        $region41: #{tpu_custom_call.1} parent=39 // pred_check
          %p218 = pneg %p43
        $region42: #{tpu_custom_call.1} parent=39 // pred_check_branch
          %220 = sbr.rel (%p218) target = $region44
        $region43: #{tpu_custom_call.1} parent=39 // pred_region
          %221 = dma.done %s214, 16384
        $region44: #{tpu_custom_call.1} parent=39 // pred_fallthru
          _
        %s222 = sand.u32 %s30, 1
        %s223 = scalar_lea.sflag [#allocation3], %s222
        %s224 = sand.u32 %s30, 1
        %s225 = smul.addr %s224, 1024
        %s226 = scalar_lea.vmem [#allocation2], %s225
        %p227 = pneg %p43
        %p228 = pneg %p40
        %p229 = pneg %p64
        %p230 = pneg %p61
        %p231 = pneg %p85
        %p232 = pneg %p82
        %p233 = pneg %p106
        %p234 = pneg %p103
        %p235 = pneg %p127
        %p236 = pneg %p124
        %p237 = pneg %p153
        %p238 = pneg %p150
        %s239 = sand.u32 %s140, 1
        %s240 = scalar_lea.sflag [#allocation4], %s239
        %s241 = sand.u32 %s140, 1
        %s242 = smul.addr %s241, 8
        %s243 = scalar_lea.vmem [#allocation5], %s242
        %s244 = smul.u32 8, %s22
        %v245 = vld [vmem:[%s217] sm:$0xff]
        %v246 = vld [vmem:[%s217 + $0x8] sm:$0xff]
        %v247 = vld [vmem:[%s217 + $0x10] sm:$0xff]
        %v248 = vld [vmem:[%s217 + $0x18] sm:$0xff]
        %v249 = vld [vmem:[%s217 + $0x20] sm:$0xff]
        %v250 = vld [vmem:[%s217 + $0x28] sm:$0xff]
        %v251 = vld [vmem:[%s217 + $0x30] sm:$0xff]
        %v252 = vld [vmem:[%s217 + $0x38] sm:$0xff]
        %v253 = vld [vmem:[%s217 + $0x40] sm:$0xff]
        %v254 = vld [vmem:[%s217 + $0x48] sm:$0xff]
        %v255 = vld [vmem:[%s217 + $0x50] sm:$0xff]
        %v256 = vld [vmem:[%s217 + $0x58] sm:$0xff]
        %v257 = vld [vmem:[%s217 + $0x60] sm:$0xff]
        %v258 = vld [vmem:[%s217 + $0x68] sm:$0xff]
        %v259 = vld [vmem:[%s217 + $0x70] sm:$0xff]
        %v260 = vld [vmem:[%s217 + $0x78] sm:$0xff]
        %v261 = vld [vmem:[%s217 + $0x80] sm:$0xff]
        %v262 = vld [vmem:[%s217 + $0x88] sm:$0xff]
        %v263 = vld [vmem:[%s217 + $0x90] sm:$0xff]
        %v264 = vld [vmem:[%s217 + $0x98] sm:$0xff]
        %v265 = vld [vmem:[%s217 + $0xa0] sm:$0xff]
        %v266 = vld [vmem:[%s217 + $0xa8] sm:$0xff]
        %v267 = vld [vmem:[%s217 + $0xb0] sm:$0xff]
        %v268 = vld [vmem:[%s217 + $0xb8] sm:$0xff]
        %v269 = vld [vmem:[%s217 + $0xc0] sm:$0xff]
        %v270 = vld [vmem:[%s217 + $0xc8] sm:$0xff]
        %v271 = vld [vmem:[%s217 + $0xd0] sm:$0xff]
        %v272 = vld [vmem:[%s217 + $0xd8] sm:$0xff]
        %v273 = vld [vmem:[%s217 + $0xe0] sm:$0xff]
        %v274 = vld [vmem:[%s217 + $0xe8] sm:$0xff]
        %v275 = vld [vmem:[%s217 + $0xf0] sm:$0xff]
        %v276 = vld [vmem:[%s217 + $0xf8] sm:$0xff]
        %v277 = vld [vmem:[%s217 + $0x100] sm:$0xff]
        %v278 = vld [vmem:[%s217 + $0x108] sm:$0xff]
        %v279 = vld [vmem:[%s217 + $0x110] sm:$0xff]
        %v280 = vld [vmem:[%s217 + $0x118] sm:$0xff]
        %v281 = vld [vmem:[%s217 + $0x120] sm:$0xff]
        %v282 = vld [vmem:[%s217 + $0x128] sm:$0xff]
        %v283 = vld [vmem:[%s217 + $0x130] sm:$0xff]
        %v284 = vld [vmem:[%s217 + $0x138] sm:$0xff]
        %v285 = vld [vmem:[%s217 + $0x140] sm:$0xff]
        %v286 = vld [vmem:[%s217 + $0x148] sm:$0xff]
        %v287 = vld [vmem:[%s217 + $0x150] sm:$0xff]
        %v288 = vld [vmem:[%s217 + $0x158] sm:$0xff]
        %v289 = vld [vmem:[%s217 + $0x160] sm:$0xff]
        %v290 = vld [vmem:[%s217 + $0x168] sm:$0xff]
        %v291 = vld [vmem:[%s217 + $0x170] sm:$0xff]
        %v292 = vld [vmem:[%s217 + $0x178] sm:$0xff]
        %v293 = vld [vmem:[%s217 + $0x180] sm:$0xff]
        %v294 = vld [vmem:[%s217 + $0x188] sm:$0xff]
        %v295 = vld [vmem:[%s217 + $0x190] sm:$0xff]
        %v296 = vld [vmem:[%s217 + $0x198] sm:$0xff]
        %v297 = vld [vmem:[%s217 + $0x1a0] sm:$0xff]
        %v298 = vld [vmem:[%s217 + $0x1a8] sm:$0xff]
        %v299 = vld [vmem:[%s217 + $0x1b0] sm:$0xff]
        %v300 = vld [vmem:[%s217 + $0x1b8] sm:$0xff]
        %v301 = vld [vmem:[%s217 + $0x1c0] sm:$0xff]
        %v302 = vld [vmem:[%s217 + $0x1c8] sm:$0xff]
        %v303 = vld [vmem:[%s217 + $0x1d0] sm:$0xff]
        %v304 = vld [vmem:[%s217 + $0x1d8] sm:$0xff]
        %v305 = vld [vmem:[%s217 + $0x1e0] sm:$0xff]
        %v306 = vld [vmem:[%s217 + $0x1e8] sm:$0xff]
        %v307 = vld [vmem:[%s217 + $0x1f0] sm:$0xff]
        %v308 = vld [vmem:[%s217 + $0x1f8] sm:$0xff]
        %v309 = vld [vmem:[%s217 + $0x200] sm:$0xff]
        %v310 = vld [vmem:[%s217 + $0x208] sm:$0xff]
        %v311 = vld [vmem:[%s217 + $0x210] sm:$0xff]
        %v312 = vld [vmem:[%s217 + $0x218] sm:$0xff]
        %v313 = vld [vmem:[%s217 + $0x220] sm:$0xff]
        %v314 = vld [vmem:[%s217 + $0x228] sm:$0xff]
        %v315 = vld [vmem:[%s217 + $0x230] sm:$0xff]
        %v316 = vld [vmem:[%s217 + $0x238] sm:$0xff]
        %v317 = vld [vmem:[%s217 + $0x240] sm:$0xff]
        %v318 = vld [vmem:[%s217 + $0x248] sm:$0xff]
        %v319 = vld [vmem:[%s217 + $0x250] sm:$0xff]
        %v320 = vld [vmem:[%s217 + $0x258] sm:$0xff]
        %v321 = vld [vmem:[%s217 + $0x260] sm:$0xff]
        %v322 = vld [vmem:[%s217 + $0x268] sm:$0xff]
        %v323 = vld [vmem:[%s217 + $0x270] sm:$0xff]
        %v324 = vld [vmem:[%s217 + $0x278] sm:$0xff]
        %v325 = vld [vmem:[%s217 + $0x280] sm:$0xff]
        %v326 = vld [vmem:[%s217 + $0x288] sm:$0xff]
        %v327 = vld [vmem:[%s217 + $0x290] sm:$0xff]
        %v328 = vld [vmem:[%s217 + $0x298] sm:$0xff]
        %v329 = vld [vmem:[%s217 + $0x2a0] sm:$0xff]
        %v330 = vld [vmem:[%s217 + $0x2a8] sm:$0xff]
        %v331 = vld [vmem:[%s217 + $0x2b0] sm:$0xff]
        %v332 = vld [vmem:[%s217 + $0x2b8] sm:$0xff]
        %v333 = vld [vmem:[%s217 + $0x2c0] sm:$0xff]
        %v334 = vld [vmem:[%s217 + $0x2c8] sm:$0xff]
        %v335 = vld [vmem:[%s217 + $0x2d0] sm:$0xff]
        %v336 = vld [vmem:[%s217 + $0x2d8] sm:$0xff]
        %v337 = vld [vmem:[%s217 + $0x2e0] sm:$0xff]
        %v338 = vld [vmem:[%s217 + $0x2e8] sm:$0xff]
        %v339 = vld [vmem:[%s217 + $0x2f0] sm:$0xff]
        %v340 = vld [vmem:[%s217 + $0x2f8] sm:$0xff]
        %v341 = vld [vmem:[%s217 + $0x300] sm:$0xff]
        %v342 = vld [vmem:[%s217 + $0x308] sm:$0xff]
        %v343 = vld [vmem:[%s217 + $0x310] sm:$0xff]
        %v344 = vld [vmem:[%s217 + $0x318] sm:$0xff]
        %v345 = vld [vmem:[%s217 + $0x320] sm:$0xff]
        %v346 = vld [vmem:[%s217 + $0x328] sm:$0xff]
        %v347 = vld [vmem:[%s217 + $0x330] sm:$0xff]
        %v348 = vld [vmem:[%s217 + $0x338] sm:$0xff]
        %v349 = vld [vmem:[%s217 + $0x340] sm:$0xff]
        %v350 = vld [vmem:[%s217 + $0x348] sm:$0xff]
        %v351 = vld [vmem:[%s217 + $0x350] sm:$0xff]
        %v352 = vld [vmem:[%s217 + $0x358] sm:$0xff]
        %v353 = vld [vmem:[%s217 + $0x360] sm:$0xff]
        %v354 = vld [vmem:[%s217 + $0x368] sm:$0xff]
        %v355 = vld [vmem:[%s217 + $0x370] sm:$0xff]
        %v356 = vld [vmem:[%s217 + $0x378] sm:$0xff]
        %v357 = vld [vmem:[%s217 + $0x380] sm:$0xff]
        %v358 = vld [vmem:[%s217 + $0x388] sm:$0xff]
        %v359 = vld [vmem:[%s217 + $0x390] sm:$0xff]
        %v360 = vld [vmem:[%s217 + $0x398] sm:$0xff]
        %v361 = vld [vmem:[%s217 + $0x3a0] sm:$0xff]
        %v362 = vld [vmem:[%s217 + $0x3a8] sm:$0xff]
        %v363 = vld [vmem:[%s217 + $0x3b0] sm:$0xff]
        %v364 = vld [vmem:[%s217 + $0x3b8] sm:$0xff]
        %v365 = vld [vmem:[%s217 + $0x3c0] sm:$0xff]
        %v366 = vld [vmem:[%s217 + $0x3c8] sm:$0xff]
        %v367 = vld [vmem:[%s217 + $0x3d0] sm:$0xff]
        %v368 = vld [vmem:[%s217 + $0x3d8] sm:$0xff]
        %v369 = vld [vmem:[%s217 + $0x3e0] sm:$0xff]
        %v370 = vld [vmem:[%s217 + $0x3e8] sm:$0xff]
        %v371 = vld [vmem:[%s217 + $0x3f0] sm:$0xff]
        %v372 = vld [vmem:[%s217 + $0x3f8] sm:$0xff]
        %v373 = vadd.f32 %v245, %v246
        %374 = vadd.xlane.f32.xlu0 %v373
        %v375 = vpop.xlane.xlu0 %374
        %v376 = vadd.f32 %v247, %v248
        %377 = vadd.xlane.f32.xlu0 %v376
        %v378 = vpop.xlane.xlu0 %377
        %v379 = vadd.f32 %v249, %v250
        %380 = vadd.xlane.f32.xlu0 %v379
        %v381 = vpop.xlane.xlu0 %380
        %v382 = vadd.f32 %v251, %v252
        %383 = vadd.xlane.f32.xlu0 %v382
        %v384 = vpop.xlane.xlu0 %383
        %v385 = vadd.f32 %v253, %v254
        %386 = vadd.xlane.f32.xlu0 %v385
        %v387 = vpop.xlane.xlu0 %386
        %v388 = vadd.f32 %v255, %v256
        %389 = vadd.xlane.f32.xlu0 %v388
        %v390 = vpop.xlane.xlu0 %389
        %v391 = vadd.f32 %v257, %v258
        %392 = vadd.xlane.f32.xlu0 %v391
        %v393 = vpop.xlane.xlu0 %392
        %v394 = vadd.f32 %v259, %v260
        %395 = vadd.xlane.f32.xlu0 %v394
        %v396 = vpop.xlane.xlu0 %395
        %v397 = vadd.f32 %v261, %v262
        %398 = vadd.xlane.f32.xlu0 %v397
        %v399 = vpop.xlane.xlu0 %398
        %v400 = vadd.f32 %v263, %v264
        %401 = vadd.xlane.f32.xlu0 %v400
        %v402 = vpop.xlane.xlu0 %401
        %v403 = vadd.f32 %v265, %v266
        %404 = vadd.xlane.f32.xlu0 %v403
        %v405 = vpop.xlane.xlu0 %404
        %v406 = vadd.f32 %v267, %v268
        %407 = vadd.xlane.f32.xlu0 %v406
        %v408 = vpop.xlane.xlu0 %407
        %v409 = vadd.f32 %v269, %v270
        %410 = vadd.xlane.f32.xlu0 %v409
        %v411 = vpop.xlane.xlu0 %410
        %v412 = vadd.f32 %v271, %v272
        %413 = vadd.xlane.f32.xlu0 %v412
        %v414 = vpop.xlane.xlu0 %413
        %v415 = vadd.f32 %v273, %v274
        %416 = vadd.xlane.f32.xlu0 %v415
        %v417 = vpop.xlane.xlu0 %416
        %v418 = vadd.f32 %v275, %v276
        %419 = vadd.xlane.f32.xlu0 %v418
        %v420 = vpop.xlane.xlu0 %419
        %v421 = vadd.f32 %v277, %v278
        %422 = vadd.xlane.f32.xlu0 %v421
        %v423 = vpop.xlane.xlu0 %422
        %v424 = vadd.f32 %v279, %v280
        %425 = vadd.xlane.f32.xlu0 %v424
        %v426 = vpop.xlane.xlu0 %425
        %v427 = vadd.f32 %v281, %v282
        %428 = vadd.xlane.f32.xlu0 %v427
        %v429 = vpop.xlane.xlu0 %428
        %v430 = vadd.f32 %v283, %v284
        %431 = vadd.xlane.f32.xlu0 %v430
        %v432 = vpop.xlane.xlu0 %431
        %v433 = vadd.f32 %v285, %v286
        %434 = vadd.xlane.f32.xlu0 %v433
        %v435 = vpop.xlane.xlu0 %434
        %v436 = vadd.f32 %v287, %v288
        %437 = vadd.xlane.f32.xlu0 %v436
        %v438 = vpop.xlane.xlu0 %437
        %v439 = vadd.f32 %v289, %v290
        %440 = vadd.xlane.f32.xlu0 %v439
        %v441 = vpop.xlane.xlu0 %440
        %v442 = vadd.f32 %v291, %v292
        %443 = vadd.xlane.f32.xlu0 %v442
        %v444 = vpop.xlane.xlu0 %443
        %v445 = vadd.f32 %v293, %v294
        %446 = vadd.xlane.f32.xlu0 %v445
        %v447 = vpop.xlane.xlu0 %446
        %v448 = vadd.f32 %v295, %v296
        %449 = vadd.xlane.f32.xlu0 %v448
        %v450 = vpop.xlane.xlu0 %449
        %v451 = vadd.f32 %v297, %v298
        %452 = vadd.xlane.f32.xlu0 %v451
        %v453 = vpop.xlane.xlu0 %452
        %v454 = vadd.f32 %v299, %v300
        %455 = vadd.xlane.f32.xlu0 %v454
        %v456 = vpop.xlane.xlu0 %455
        %v457 = vadd.f32 %v301, %v302
        %458 = vadd.xlane.f32.xlu0 %v457
        %v459 = vpop.xlane.xlu0 %458
        %v460 = vadd.f32 %v303, %v304
        %461 = vadd.xlane.f32.xlu0 %v460
        %v462 = vpop.xlane.xlu0 %461
        %v463 = vadd.f32 %v305, %v306
        %464 = vadd.xlane.f32.xlu0 %v463
        %v465 = vpop.xlane.xlu0 %464
        %v466 = vadd.f32 %v307, %v308
        %467 = vadd.xlane.f32.xlu0 %v466
        %v468 = vpop.xlane.xlu0 %467
        %v469 = vadd.f32 %v309, %v310
        %470 = vadd.xlane.f32.xlu0 %v469
        %v471 = vpop.xlane.xlu0 %470
        %v472 = vadd.f32 %v311, %v312
        %473 = vadd.xlane.f32.xlu0 %v472
        %v474 = vpop.xlane.xlu0 %473
        %v475 = vadd.f32 %v313, %v314
        %476 = vadd.xlane.f32.xlu0 %v475
        %v477 = vpop.xlane.xlu0 %476
        %v478 = vadd.f32 %v315, %v316
        %479 = vadd.xlane.f32.xlu0 %v478
        %v480 = vpop.xlane.xlu0 %479
        %v481 = vadd.f32 %v317, %v318
        %482 = vadd.xlane.f32.xlu0 %v481
        %v483 = vpop.xlane.xlu0 %482
        %v484 = vadd.f32 %v319, %v320
        %485 = vadd.xlane.f32.xlu0 %v484
        %v486 = vpop.xlane.xlu0 %485
        %v487 = vadd.f32 %v321, %v322
        %488 = vadd.xlane.f32.xlu0 %v487
        %v489 = vpop.xlane.xlu0 %488
        %v490 = vadd.f32 %v323, %v324
        %491 = vadd.xlane.f32.xlu0 %v490
        %v492 = vpop.xlane.xlu0 %491
        %v493 = vadd.f32 %v325, %v326
        %494 = vadd.xlane.f32.xlu0 %v493
        %v495 = vpop.xlane.xlu0 %494
        %v496 = vadd.f32 %v327, %v328
        %497 = vadd.xlane.f32.xlu0 %v496
        %v498 = vpop.xlane.xlu0 %497
        %v499 = vadd.f32 %v329, %v330
        %500 = vadd.xlane.f32.xlu0 %v499
        %v501 = vpop.xlane.xlu0 %500
        %v502 = vadd.f32 %v331, %v332
        %503 = vadd.xlane.f32.xlu0 %v502
        %v504 = vpop.xlane.xlu0 %503
        %v505 = vadd.f32 %v333, %v334
        %506 = vadd.xlane.f32.xlu0 %v505
        %v507 = vpop.xlane.xlu0 %506
        %v508 = vadd.f32 %v335, %v336
        %509 = vadd.xlane.f32.xlu0 %v508
        %v510 = vpop.xlane.xlu0 %509
        %v511 = vadd.f32 %v337, %v338
        %512 = vadd.xlane.f32.xlu0 %v511
        %v513 = vpop.xlane.xlu0 %512
        %v514 = vadd.f32 %v339, %v340
        %515 = vadd.xlane.f32.xlu0 %v514
        %v516 = vpop.xlane.xlu0 %515
        %v517 = vadd.f32 %v341, %v342
        %518 = vadd.xlane.f32.xlu0 %v517
        %v519 = vpop.xlane.xlu0 %518
        %v520 = vadd.f32 %v343, %v344
        %521 = vadd.xlane.f32.xlu0 %v520
        %v522 = vpop.xlane.xlu0 %521
        %v523 = vadd.f32 %v345, %v346
        %524 = vadd.xlane.f32.xlu0 %v523
        %v525 = vpop.xlane.xlu0 %524
        %v526 = vadd.f32 %v347, %v348
        %527 = vadd.xlane.f32.xlu0 %v526
        %v528 = vpop.xlane.xlu0 %527
        %v529 = vadd.f32 %v349, %v350
        %530 = vadd.xlane.f32.xlu0 %v529
        %v531 = vpop.xlane.xlu0 %530
        %v532 = vadd.f32 %v351, %v352
        %533 = vadd.xlane.f32.xlu0 %v532
        %v534 = vpop.xlane.xlu0 %533
        %v535 = vadd.f32 %v353, %v354
        %536 = vadd.xlane.f32.xlu0 %v535
        %v537 = vpop.xlane.xlu0 %536
        %v538 = vadd.f32 %v355, %v356
        %539 = vadd.xlane.f32.xlu0 %v538
        %v540 = vpop.xlane.xlu0 %539
        %v541 = vadd.f32 %v357, %v358
        %542 = vadd.xlane.f32.xlu0 %v541
        %v543 = vpop.xlane.xlu0 %542
        %v544 = vadd.f32 %v359, %v360
        %545 = vadd.xlane.f32.xlu0 %v544
        %v546 = vpop.xlane.xlu0 %545
        %v547 = vadd.f32 %v361, %v362
        %548 = vadd.xlane.f32.xlu0 %v547
        %v549 = vpop.xlane.xlu0 %548
        %v550 = vadd.f32 %v363, %v364
        %551 = vadd.xlane.f32.xlu0 %v550
        %v552 = vpop.xlane.xlu0 %551
        %v553 = vadd.f32 %v365, %v366
        %554 = vadd.xlane.f32.xlu0 %v553
        %v555 = vpop.xlane.xlu0 %554
        %v556 = vadd.f32 %v367, %v368
        %557 = vadd.xlane.f32.xlu0 %v556
        %v558 = vpop.xlane.xlu0 %557
        %v559 = vadd.f32 %v369, %v370
        %560 = vadd.xlane.f32.xlu0 %v559
        %v561 = vpop.xlane.xlu0 %560
        %v562 = vadd.f32 %v371, %v372
        %563 = vadd.xlane.f32.xlu0 %v562
        %v564 = vpop.xlane.xlu0 %563
        %v565 = vmul.f32 %v375, 0.00390625
        %v566 = vmul.f32 %v378, 0.00390625
        %v567 = vmul.f32 %v381, 0.00390625
        %v568 = vmul.f32 %v384, 0.00390625
        %v569 = vmul.f32 %v387, 0.00390625
        %v570 = vmul.f32 %v390, 0.00390625
        %v571 = vmul.f32 %v393, 0.00390625
        %v572 = vmul.f32 %v396, 0.00390625
        %v573 = vmul.f32 %v399, 0.00390625
        %v574 = vmul.f32 %v402, 0.00390625
        %v575 = vmul.f32 %v405, 0.00390625
        %v576 = vmul.f32 %v408, 0.00390625
        %v577 = vmul.f32 %v411, 0.00390625
        %v578 = vmul.f32 %v414, 0.00390625
        %v579 = vmul.f32 %v417, 0.00390625
        %v580 = vmul.f32 %v420, 0.00390625
        %v581 = vmul.f32 %v423, 0.00390625
        %v582 = vmul.f32 %v426, 0.00390625
        %v583 = vmul.f32 %v429, 0.00390625
        %v584 = vmul.f32 %v432, 0.00390625
        %v585 = vmul.f32 %v435, 0.00390625
        %v586 = vmul.f32 %v438, 0.00390625
        %v587 = vmul.f32 %v441, 0.00390625
        %v588 = vmul.f32 %v444, 0.00390625
        %v589 = vmul.f32 %v447, 0.00390625
        %v590 = vmul.f32 %v450, 0.00390625
        %v591 = vmul.f32 %v453, 0.00390625
        %v592 = vmul.f32 %v456, 0.00390625
        %v593 = vmul.f32 %v459, 0.00390625
        %v594 = vmul.f32 %v462, 0.00390625
        %v595 = vmul.f32 %v465, 0.00390625
        %v596 = vmul.f32 %v468, 0.00390625
        %v597 = vmul.f32 %v471, 0.00390625
        %v598 = vmul.f32 %v474, 0.00390625
        %v599 = vmul.f32 %v477, 0.00390625
        %v600 = vmul.f32 %v480, 0.00390625
        %v601 = vmul.f32 %v483, 0.00390625
        %v602 = vmul.f32 %v486, 0.00390625
        %v603 = vmul.f32 %v489, 0.00390625
        %v604 = vmul.f32 %v492, 0.00390625
        %v605 = vmul.f32 %v495, 0.00390625
        %v606 = vmul.f32 %v498, 0.00390625
        %v607 = vmul.f32 %v501, 0.00390625
        %v608 = vmul.f32 %v504, 0.00390625
        %v609 = vmul.f32 %v507, 0.00390625
        %v610 = vmul.f32 %v510, 0.00390625
        %v611 = vmul.f32 %v513, 0.00390625
        %v612 = vmul.f32 %v516, 0.00390625
        %v613 = vmul.f32 %v519, 0.00390625
        %v614 = vmul.f32 %v522, 0.00390625
        %v615 = vmul.f32 %v525, 0.00390625
        %v616 = vmul.f32 %v528, 0.00390625
        %v617 = vmul.f32 %v531, 0.00390625
        %v618 = vmul.f32 %v534, 0.00390625
        %v619 = vmul.f32 %v537, 0.00390625
        %v620 = vmul.f32 %v540, 0.00390625
        %v621 = vmul.f32 %v543, 0.00390625
        %v622 = vmul.f32 %v546, 0.00390625
        %v623 = vmul.f32 %v549, 0.00390625
        %v624 = vmul.f32 %v552, 0.00390625
        %v625 = vmul.f32 %v555, 0.00390625
        %v626 = vmul.f32 %v558, 0.00390625
        %v627 = vmul.f32 %v561, 0.00390625
        %v628 = vmul.f32 %v564, 0.00390625
        %v629 = vld [vmem:[%s1] sm:$0xff]
        %v630 = vld [vmem:[%s1 + $0x8] sm:$0xff]
        %v631 = vld [vmem:[%s1 + $0x10] sm:$0xff]
        %v632 = vld [vmem:[%s1 + $0x18] sm:$0xff]
        %v633 = vld [vmem:[%s1 + $0x20] sm:$0xff]
        %v634 = vld [vmem:[%s1 + $0x28] sm:$0xff]
        %v635 = vld [vmem:[%s1 + $0x30] sm:$0xff]
        %v636 = vld [vmem:[%s1 + $0x38] sm:$0xff]
        %v637 = vld [vmem:[%s2] sm:$0x1]
        %v639 = vlaneseq
        %v640 = vshrl.u32 %v639, 7
        %v641 = vsub.s32 0, %v640
        %v642 = vrot.slane %v637, %v641
        %v708 = vlaneseq
        %v709 = vand.u32 %v708, 127
        %v710 = vlaneseq
        %v711 = vshrl.u32 %v710, 7
        %v712 = vsub.s32 %v709, %v711
        %v713 = vrot.slane %v565, %v712
        %v714 = vadd.s32 %v709, 4294967288
        %v715 = vlaneseq
        %v716 = vshrl.u32 %v715, 7
        %v717 = vsub.s32 %v714, %v716
        %v718 = vrot.slane %v566, %v717
        %vm719 = vcmask 130112
        %v720 = vsel %vm719, %v718, %v713
        %v721 = vadd.s32 %v709, 4294967280
        %v722 = vlaneseq
        %v723 = vshrl.u32 %v722, 7
        %v724 = vsub.s32 %v721, %v723
        %v725 = vrot.slane %v567, %v724
        %vm726 = vcmask 195712
        %v727 = vsel %vm726, %v725, %v720
        %v728 = vadd.s32 %v709, 4294967272
        %v729 = vlaneseq
        %v730 = vshrl.u32 %v729, 7
        %v731 = vsub.s32 %v728, %v730
        %v732 = vrot.slane %v568, %v731
        %vm733 = vcmask 261312
        %v734 = vsel %vm733, %v732, %v727
        %v735 = vadd.s32 %v709, 4294967264
        %v736 = vlaneseq
        %v737 = vshrl.u32 %v736, 7
        %v738 = vsub.s32 %v735, %v737
        %v739 = vrot.slane %v569, %v738
        %vm740 = vcmask 326912
        %v741 = vsel %vm740, %v739, %v734
        %v742 = vadd.s32 %v709, 4294967256
        %v743 = vlaneseq
        %v744 = vshrl.u32 %v743, 7
        %v745 = vsub.s32 %v742, %v744
        %v746 = vrot.slane %v570, %v745
        %vm747 = vcmask 392512
        %v748 = vsel %vm747, %v746, %v741
        %v749 = vadd.s32 %v709, 4294967248
        %v750 = vlaneseq
        %v751 = vshrl.u32 %v750, 7
        %v752 = vsub.s32 %v749, %v751
        %v753 = vrot.slane %v571, %v752
        %vm754 = vcmask 458112
        %v755 = vsel %vm754, %v753, %v748
        %v756 = vadd.s32 %v709, 4294967240
        %v757 = vlaneseq
        %v758 = vshrl.u32 %v757, 7
        %v759 = vsub.s32 %v756, %v758
        %v760 = vrot.slane %v572, %v759
        %vm761 = vcmask 523712
        %v762 = vsel %vm761, %v760, %v755
        %v763 = vlaneseq
        %v764 = vshrl.u32 %v763, 7
        %v765 = vsub.s32 %v709, %v764
        %v766 = vrot.slane %v573, %v765
        %v767 = vlaneseq
        %v768 = vshrl.u32 %v767, 7
        %v769 = vsub.s32 %v714, %v768
        %v770 = vrot.slane %v574, %v769
        %v771 = vsel %vm719, %v770, %v766
        %v772 = vlaneseq
        %v773 = vshrl.u32 %v772, 7
        %v774 = vsub.s32 %v721, %v773
        %v775 = vrot.slane %v575, %v774
        %v776 = vsel %vm726, %v775, %v771
        %v777 = vlaneseq
        %v778 = vshrl.u32 %v777, 7
        %v779 = vsub.s32 %v728, %v778
        %v780 = vrot.slane %v576, %v779
        %v781 = vsel %vm733, %v780, %v776
        %v782 = vlaneseq
        %v783 = vshrl.u32 %v782, 7
        %v784 = vsub.s32 %v735, %v783
        %v785 = vrot.slane %v577, %v784
        %v786 = vsel %vm740, %v785, %v781
        %v787 = vlaneseq
        %v788 = vshrl.u32 %v787, 7
        %v789 = vsub.s32 %v742, %v788
        %v790 = vrot.slane %v578, %v789
        %v791 = vsel %vm747, %v790, %v786
        %v792 = vlaneseq
        %v793 = vshrl.u32 %v792, 7
        %v794 = vsub.s32 %v749, %v793
        %v795 = vrot.slane %v579, %v794
        %v796 = vsel %vm754, %v795, %v791
        %v797 = vlaneseq
        %v798 = vshrl.u32 %v797, 7
        %v799 = vsub.s32 %v756, %v798
        %v800 = vrot.slane %v580, %v799
        %v801 = vsel %vm761, %v800, %v796
        %v802 = vlaneseq
        %v803 = vshrl.u32 %v802, 7
        %v804 = vsub.s32 %v709, %v803
        %v805 = vrot.slane %v581, %v804
        %v806 = vlaneseq
        %v807 = vshrl.u32 %v806, 7
        %v808 = vsub.s32 %v714, %v807
        %v809 = vrot.slane %v582, %v808
        %v810 = vsel %vm719, %v809, %v805
        %v811 = vlaneseq
        %v812 = vshrl.u32 %v811, 7
        %v813 = vsub.s32 %v721, %v812
        %v814 = vrot.slane %v583, %v813
        %v815 = vsel %vm726, %v814, %v810
        %v816 = vlaneseq
        %v817 = vshrl.u32 %v816, 7
        %v818 = vsub.s32 %v728, %v817
        %v819 = vrot.slane %v584, %v818
        %v820 = vsel %vm733, %v819, %v815
        %v821 = vlaneseq
        %v822 = vshrl.u32 %v821, 7
        %v823 = vsub.s32 %v735, %v822
        %v824 = vrot.slane %v585, %v823
        %v825 = vsel %vm740, %v824, %v820
        %v826 = vlaneseq
        %v827 = vshrl.u32 %v826, 7
        %v828 = vsub.s32 %v742, %v827
        %v829 = vrot.slane %v586, %v828
        %v830 = vsel %vm747, %v829, %v825
        %v831 = vlaneseq
        %v832 = vshrl.u32 %v831, 7
        %v833 = vsub.s32 %v749, %v832
        %v834 = vrot.slane %v587, %v833
        %v835 = vsel %vm754, %v834, %v830
        %v836 = vlaneseq
        %v837 = vshrl.u32 %v836, 7
        %v838 = vsub.s32 %v756, %v837
        %v839 = vrot.slane %v588, %v838
        %v840 = vsel %vm761, %v839, %v835
        %v841 = vlaneseq
        %v842 = vshrl.u32 %v841, 7
        %v843 = vsub.s32 %v709, %v842
        %v844 = vrot.slane %v589, %v843
        %v845 = vlaneseq
        %v846 = vshrl.u32 %v845, 7
        %v847 = vsub.s32 %v714, %v846
        %v848 = vrot.slane %v590, %v847
        %v849 = vsel %vm719, %v848, %v844
        %v850 = vlaneseq
        %v851 = vshrl.u32 %v850, 7
        %v852 = vsub.s32 %v721, %v851
        %v853 = vrot.slane %v591, %v852
        %v854 = vsel %vm726, %v853, %v849
        %v855 = vlaneseq
        %v856 = vshrl.u32 %v855, 7
        %v857 = vsub.s32 %v728, %v856
        %v858 = vrot.slane %v592, %v857
        %v859 = vsel %vm733, %v858, %v854
        %v860 = vlaneseq
        %v861 = vshrl.u32 %v860, 7
        %v862 = vsub.s32 %v735, %v861
        %v863 = vrot.slane %v593, %v862
        %v864 = vsel %vm740, %v863, %v859
        %v865 = vlaneseq
        %v866 = vshrl.u32 %v865, 7
        %v867 = vsub.s32 %v742, %v866
        %v868 = vrot.slane %v594, %v867
        %v869 = vsel %vm747, %v868, %v864
        %v870 = vlaneseq
        %v871 = vshrl.u32 %v870, 7
        %v872 = vsub.s32 %v749, %v871
        %v873 = vrot.slane %v595, %v872
        %v874 = vsel %vm754, %v873, %v869
        %v875 = vlaneseq
        %v876 = vshrl.u32 %v875, 7
        %v877 = vsub.s32 %v756, %v876
        %v878 = vrot.slane %v596, %v877
        %v879 = vsel %vm761, %v878, %v874
        %v880 = vlaneseq
        %v881 = vshrl.u32 %v880, 7
        %v882 = vsub.s32 %v709, %v881
        %v883 = vrot.slane %v597, %v882
        %v884 = vlaneseq
        %v885 = vshrl.u32 %v884, 7
        %v886 = vsub.s32 %v714, %v885
        %v887 = vrot.slane %v598, %v886
        %v888 = vsel %vm719, %v887, %v883
        %v889 = vlaneseq
        %v890 = vshrl.u32 %v889, 7
        %v891 = vsub.s32 %v721, %v890
        %v892 = vrot.slane %v599, %v891
        %v893 = vsel %vm726, %v892, %v888
        %v894 = vlaneseq
        %v895 = vshrl.u32 %v894, 7
        %v896 = vsub.s32 %v728, %v895
        %v897 = vrot.slane %v600, %v896
        %v898 = vsel %vm733, %v897, %v893
        %v899 = vlaneseq
        %v900 = vshrl.u32 %v899, 7
        %v901 = vsub.s32 %v735, %v900
        %v902 = vrot.slane %v601, %v901
        %v903 = vsel %vm740, %v902, %v898
        %v904 = vlaneseq
        %v905 = vshrl.u32 %v904, 7
        %v906 = vsub.s32 %v742, %v905
        %v907 = vrot.slane %v602, %v906
        %v908 = vsel %vm747, %v907, %v903
        %v909 = vlaneseq
        %v910 = vshrl.u32 %v909, 7
        %v911 = vsub.s32 %v749, %v910
        %v912 = vrot.slane %v603, %v911
        %v913 = vsel %vm754, %v912, %v908
        %v914 = vlaneseq
        %v915 = vshrl.u32 %v914, 7
        %v916 = vsub.s32 %v756, %v915
        %v917 = vrot.slane %v604, %v916
        %v918 = vsel %vm761, %v917, %v913
        %v919 = vlaneseq
        %v920 = vshrl.u32 %v919, 7
        %v921 = vsub.s32 %v709, %v920
        %v922 = vrot.slane %v605, %v921
        %v923 = vlaneseq
        %v924 = vshrl.u32 %v923, 7
        %v925 = vsub.s32 %v714, %v924
        %v926 = vrot.slane %v606, %v925
        %v927 = vsel %vm719, %v926, %v922
        %v928 = vlaneseq
        %v929 = vshrl.u32 %v928, 7
        %v930 = vsub.s32 %v721, %v929
        %v931 = vrot.slane %v607, %v930
        %v932 = vsel %vm726, %v931, %v927
        %v933 = vlaneseq
        %v934 = vshrl.u32 %v933, 7
        %v935 = vsub.s32 %v728, %v934
        %v936 = vrot.slane %v608, %v935
        %v937 = vsel %vm733, %v936, %v932
        %v938 = vlaneseq
        %v939 = vshrl.u32 %v938, 7
        %v940 = vsub.s32 %v735, %v939
        %v941 = vrot.slane %v609, %v940
        %v942 = vsel %vm740, %v941, %v937
        %v943 = vlaneseq
        %v944 = vshrl.u32 %v943, 7
        %v945 = vsub.s32 %v742, %v944
        %v946 = vrot.slane %v610, %v945
        %v947 = vsel %vm747, %v946, %v942
        %v948 = vlaneseq
        %v949 = vshrl.u32 %v948, 7
        %v950 = vsub.s32 %v749, %v949
        %v951 = vrot.slane %v611, %v950
        %v952 = vsel %vm754, %v951, %v947
        %v953 = vlaneseq
        %v954 = vshrl.u32 %v953, 7
        %v955 = vsub.s32 %v756, %v954
        %v956 = vrot.slane %v612, %v955
        %v957 = vsel %vm761, %v956, %v952
        %v958 = vlaneseq
        %v959 = vshrl.u32 %v958, 7
        %v960 = vsub.s32 %v709, %v959
        %v961 = vrot.slane %v613, %v960
        %v962 = vlaneseq
        %v963 = vshrl.u32 %v962, 7
        %v964 = vsub.s32 %v714, %v963
        %v965 = vrot.slane %v614, %v964
        %v966 = vsel %vm719, %v965, %v961
        %v967 = vlaneseq
        %v968 = vshrl.u32 %v967, 7
        %v969 = vsub.s32 %v721, %v968
        %v970 = vrot.slane %v615, %v969
        %v971 = vsel %vm726, %v970, %v966
        %v972 = vlaneseq
        %v973 = vshrl.u32 %v972, 7
        %v974 = vsub.s32 %v728, %v973
        %v975 = vrot.slane %v616, %v974
        %v976 = vsel %vm733, %v975, %v971
        %v977 = vlaneseq
        %v978 = vshrl.u32 %v977, 7
        %v979 = vsub.s32 %v735, %v978
        %v980 = vrot.slane %v617, %v979
        %v981 = vsel %vm740, %v980, %v976
        %v982 = vlaneseq
        %v983 = vshrl.u32 %v982, 7
        %v984 = vsub.s32 %v742, %v983
        %v985 = vrot.slane %v618, %v984
        %v986 = vsel %vm747, %v985, %v981
        %v987 = vlaneseq
        %v988 = vshrl.u32 %v987, 7
        %v989 = vsub.s32 %v749, %v988
        %v990 = vrot.slane %v619, %v989
        %v991 = vsel %vm754, %v990, %v986
        %v992 = vlaneseq
        %v993 = vshrl.u32 %v992, 7
        %v994 = vsub.s32 %v756, %v993
        %v995 = vrot.slane %v620, %v994
        %v996 = vsel %vm761, %v995, %v991
        %v997 = vlaneseq
        %v998 = vshrl.u32 %v997, 7
        %v999 = vsub.s32 %v709, %v998
        %v1000 = vrot.slane %v621, %v999
        %v1001 = vlaneseq
        %v1002 = vshrl.u32 %v1001, 7
        %v1003 = vsub.s32 %v714, %v1002
        %v1004 = vrot.slane %v622, %v1003
        %v1005 = vsel %vm719, %v1004, %v1000
        %v1006 = vlaneseq
        %v1007 = vshrl.u32 %v1006, 7
        %v1008 = vsub.s32 %v721, %v1007
        %v1009 = vrot.slane %v623, %v1008
        %v1010 = vsel %vm726, %v1009, %v1005
        %v1011 = vlaneseq
        %v1012 = vshrl.u32 %v1011, 7
        %v1013 = vsub.s32 %v728, %v1012
        %v1014 = vrot.slane %v624, %v1013
        %v1015 = vsel %vm733, %v1014, %v1010
        %v1016 = vlaneseq
        %v1017 = vshrl.u32 %v1016, 7
        %v1018 = vsub.s32 %v735, %v1017
        %v1019 = vrot.slane %v625, %v1018
        %v1020 = vsel %vm740, %v1019, %v1015
        %v1021 = vlaneseq
        %v1022 = vshrl.u32 %v1021, 7
        %v1023 = vsub.s32 %v742, %v1022
        %v1024 = vrot.slane %v626, %v1023
        %v1025 = vsel %vm747, %v1024, %v1020
        %v1026 = vlaneseq
        %v1027 = vshrl.u32 %v1026, 7
        %v1028 = vsub.s32 %v749, %v1027
        %v1029 = vrot.slane %v627, %v1028
        %v1030 = vsel %vm754, %v1029, %v1025
        %v1031 = vlaneseq
        %v1032 = vshrl.u32 %v1031, 7
        %v1033 = vsub.s32 %v756, %v1032
        %v1034 = vrot.slane %v628, %v1033
        %v1035 = vsel %vm761, %v1034, %v1030
        %vm1036 = vcmask 1041409
        %v1037 = vsel %vm1036, %v801, %v762
        %vm1038 = vcmask 1042434
        %v1039 = vsel %vm1038, %v840, %v1037
        %vm1040 = vcmask 1043459
        %v1041 = vsel %vm1040, %v879, %v1039
        %vm1042 = vcmask 1044484
        %v1043 = vsel %vm1042, %v918, %v1041
        %vm1044 = vcmask 1045509
        %v1045 = vsel %vm1044, %v957, %v1043
        %vm1046 = vcmask 1046534
        %v1047 = vsel %vm1046, %v996, %v1045
        %vm1048 = vcmask 1047559
        %v1049 = vsel %vm1048, %v1035, %v1047
        %vm1050 = vcmask 523264
        %v1051 = vsel %vm1050, %v1049, 0
        %1053 = vmatprep.subr.mxu0 0.0
        %1054 = vmatpush1.msra.mxu0 %v629
        %1055 = vmatprep.subr.mxu0 0.0
        %1056 = vmatpush1.msra.mxu0 %v630
        %1057 = vmatprep.subr.mxu0 0.0
        %1058 = vmatpush1.msra.mxu0 %v631
        %1059 = vmatprep.subr.mxu0 0.0
        %1060 = vmatpush1.msra.mxu0 %v632
        %1061 = vmatprep.subr.mxu0 0.0
        %1062 = vmatpush1.msra.mxu0 %v633
        %1063 = vmatprep.subr.mxu0 0.0
        %1064 = vmatpush1.msra.mxu0 %v634
        %1065 = vmatprep.subr.mxu0 0.0
        %1066 = vmatpush1.msra.mxu0 %v635
        %1067 = vmatprep.subr.mxu0 0.0
        %1068 = vmatpush1.msra.mxu0 %v636
        %1069 = vmatprep.subr.mxu0 0.0
        %1070 = vmatpush1.msra.mxu0 0.0
        %1071 = vmatprep.subr.mxu0 0.0
        %1072 = vmatpush1.msra.mxu0 0.0
        %1073 = vmatprep.subr.mxu0 0.0
        %1074 = vmatpush1.msra.mxu0 0.0
        %1075 = vmatprep.subr.mxu0 0.0
        %1076 = vmatpush1.msra.mxu0 0.0
        %1077 = vmatprep.subr.mxu0 0.0
        %1078 = vmatpush1.msra.mxu0 0.0
        %1079 = vmatprep.subr.mxu0 0.0
        %1080 = vmatpush1.msra.mxu0 0.0
        %1081 = vmatprep.subr.mxu0 0.0
        %1082 = vmatpush1.msra.mxu0 0.0
        %1083 = vmatprep.subr.mxu0 0.0
        %1084 = vmatpush1.msra.mxu0 0.0
        %1085 = vmatprep.subr.mxu0 0.0
        %1086 = vmatpush1.msra.mxu0 0.0
        %1087 = vmatprep.subr.mxu0 0.0
        %1088 = vmatpush1.msra.mxu0 0.0
        %1089 = vmatprep.subr.mxu0 0.0
        %1090 = vmatpush1.msra.mxu0 0.0
        %1091 = vmatprep.subr.mxu0 0.0
        %1092 = vmatpush1.msra.mxu0 0.0
        %1093 = vmatprep.subr.mxu0 0.0
        %1094 = vmatpush1.msra.mxu0 0.0
        %1095 = vmatprep.subr.mxu0 0.0
        %1096 = vmatpush1.msra.mxu0 0.0
        %1097 = vmatprep.subr.mxu0 0.0
        %1098 = vmatpush1.msra.mxu0 0.0
        %1099 = vmatprep.subr.mxu0 0.0
        %1100 = vmatpush1.msra.mxu0 0.0
        %1101 = vmatprep.subr.mxu0 0.0
        %1102 = vmatpush1.msra.mxu0 0.0
        %1103 = vmatprep.subr.mxu0 0.0
        %1104 = vmatpush1.msra.mxu0 0.0
        %1105 = vmatprep.subr.mxu0 0.0
        %1106 = vmatpush1.msra.mxu0 0.0
        %1107 = vmatprep.subr.mxu0 0.0
        %1108 = vmatpush1.msra.mxu0 0.0
        %1109 = vmatprep.subr.mxu0 0.0
        %1110 = vmatpush1.msra.mxu0 0.0
        %1111 = vmatprep.subr.mxu0 0.0
        %1112 = vmatpush1.msra.mxu0 0.0
        %1113 = vmatprep.subr.mxu0 0.0
        %1114 = vmatpush1.msra.mxu0 0.0
        %1115 = vmatprep.subr.mxu0 0.0
        %1116 = vmatpush1.msra.mxu0 0.0
        %1117 = vmatprep.mubr.f32.mxu0 0.0
        %1118 = vmatmul.mubr.f32.gmra.mrb[0].mxu0 %v1051
        %v1119 = vpop.f32.mrb[0].mxu0
        %v1120 = vadd.f32 %v642, %v1119
        %v1121 = vpop.f32.mrb[0].mxu0
        %1122 = vdwg.mxu0
        %v1123 = vmax.f32 %v1120, 0.0
        %v1124 = vld [vmem:[%s3] sm:$0xff]
        %v1125 = vld [vmem:[%s3 + $0x8] sm:$0xff]
        %v1126 = vld [vmem:[%s3 + $0x10] sm:$0xff]
        %v1127 = vld [vmem:[%s3 + $0x18] sm:$0xff]
        %v1128 = vld [vmem:[%s3 + $0x20] sm:$0xff]
        %v1129 = vld [vmem:[%s3 + $0x28] sm:$0xff]
        %v1130 = vld [vmem:[%s3 + $0x30] sm:$0xff]
        %v1131 = vld [vmem:[%s3 + $0x38] sm:$0xff]
        %v1132 = vld [vmem:[%s3 + $0x40] sm:$0xff]
        %v1133 = vld [vmem:[%s3 + $0x48] sm:$0xff]
        %v1134 = vld [vmem:[%s3 + $0x50] sm:$0xff]
        %v1135 = vld [vmem:[%s3 + $0x58] sm:$0xff]
        %v1136 = vld [vmem:[%s3 + $0x60] sm:$0xff]
        %v1137 = vld [vmem:[%s3 + $0x68] sm:$0xff]
        %v1138 = vld [vmem:[%s3 + $0x70] sm:$0xff]
        %v1139 = vld [vmem:[%s3 + $0x78] sm:$0xff]
        %v1140 = vld [vmem:[%s4] sm:$0x1]
        %v1142 = vlaneseq
        %v1143 = vshrl.u32 %v1142, 7
        %v1144 = vsub.s32 0, %v1143
        %v1145 = vrot.slane %v1140, %v1144
        %1147 = vmatprep.subr.mxu0 0.0
        %1148 = vmatpush1.msra.mxu0 %v1124
        %1149 = vmatprep.subr.mxu0 0.0
        %1150 = vmatpush1.msra.mxu0 %v1125
        %1151 = vmatprep.subr.mxu0 0.0
        %1152 = vmatpush1.msra.mxu0 %v1126
        %1153 = vmatprep.subr.mxu0 0.0
        %1154 = vmatpush1.msra.mxu0 %v1127
        %1155 = vmatprep.subr.mxu0 0.0
        %1156 = vmatpush1.msra.mxu0 %v1128
        %1157 = vmatprep.subr.mxu0 0.0
        %1158 = vmatpush1.msra.mxu0 %v1129
        %1159 = vmatprep.subr.mxu0 0.0
        %1160 = vmatpush1.msra.mxu0 %v1130
        %1161 = vmatprep.subr.mxu0 0.0
        %1162 = vmatpush1.msra.mxu0 %v1131
        %1163 = vmatprep.subr.mxu0 0.0
        %1164 = vmatpush1.msra.mxu0 %v1132
        %1165 = vmatprep.subr.mxu0 0.0
        %1166 = vmatpush1.msra.mxu0 %v1133
        %1167 = vmatprep.subr.mxu0 0.0
        %1168 = vmatpush1.msra.mxu0 %v1134
        %1169 = vmatprep.subr.mxu0 0.0
        %1170 = vmatpush1.msra.mxu0 %v1135
        %1171 = vmatprep.subr.mxu0 0.0
        %1172 = vmatpush1.msra.mxu0 %v1136
        %1173 = vmatprep.subr.mxu0 0.0
        %1174 = vmatpush1.msra.mxu0 %v1137
        %1175 = vmatprep.subr.mxu0 0.0
        %1176 = vmatpush1.msra.mxu0 %v1138
        %1177 = vmatprep.subr.mxu0 0.0
        %1178 = vmatpush1.msra.mxu0 %v1139
        %1179 = vmatprep.subr.mxu0 0.0
        %1180 = vmatpush1.msra.mxu0 0.0
        %1181 = vmatprep.subr.mxu0 0.0
        %1182 = vmatpush1.msra.mxu0 0.0
        %1183 = vmatprep.subr.mxu0 0.0
        %1184 = vmatpush1.msra.mxu0 0.0
        %1185 = vmatprep.subr.mxu0 0.0
        %1186 = vmatpush1.msra.mxu0 0.0
        %1187 = vmatprep.subr.mxu0 0.0
        %1188 = vmatpush1.msra.mxu0 0.0
        %1189 = vmatprep.subr.mxu0 0.0
        %1190 = vmatpush1.msra.mxu0 0.0
        %1191 = vmatprep.subr.mxu0 0.0
        %1192 = vmatpush1.msra.mxu0 0.0
        %1193 = vmatprep.subr.mxu0 0.0
        %1194 = vmatpush1.msra.mxu0 0.0
        %1195 = vmatprep.subr.mxu0 0.0
        %1196 = vmatpush1.msra.mxu0 0.0
        %1197 = vmatprep.subr.mxu0 0.0
        %1198 = vmatpush1.msra.mxu0 0.0
        %1199 = vmatprep.subr.mxu0 0.0
        %1200 = vmatpush1.msra.mxu0 0.0
        %1201 = vmatprep.subr.mxu0 0.0
        %1202 = vmatpush1.msra.mxu0 0.0
        %1203 = vmatprep.subr.mxu0 0.0
        %1204 = vmatpush1.msra.mxu0 0.0
        %1205 = vmatprep.subr.mxu0 0.0
        %1206 = vmatpush1.msra.mxu0 0.0
        %1207 = vmatprep.subr.mxu0 0.0
        %1208 = vmatpush1.msra.mxu0 0.0
        %1209 = vmatprep.subr.mxu0 0.0
        %1210 = vmatpush1.msra.mxu0 0.0
        %1211 = vmatprep.mubr.f32.mxu0 0.0
        %1212 = vmatmul.mubr.f32.gmra.mrb[0].mxu0 %v1123
        %v1213 = vpop.f32.mrb[0].mxu0
        %v1214 = vadd.f32 %v1145, %v1213
        %v1215 = vpop.f32.mrb[0].mxu0
        %1216 = vdwg.mxu0
        %v1217 = vxor.u32 %v1214, 2147483648
        %v1218 = vmul.f32 %v1217, 1.442695
        %v1219 = vpow.pop %v1218
        %v1220 = vadd.f32 %v1219, 1.0
        %v1221 = vrcp.pop %v1220
        %v1222 = vmul.f32 1.0, %v1221
        %1223 = vst.msk [vmem:[%s243] sm:$0xff] %vm1050, %v1222
        %s1224 = sand.u32 %s140, 1
        %s1225 = scalar_lea.sflag [#allocation4], %s1224
        %s1226 = sand.u32 %s140, 1
        %s1227 = smul.addr %s1226, 8
        %s1228 = scalar_lea.vmem [#allocation5], %s1227
        // Predicated region
        $region45: #{tpu_custom_call.1} parent=39 // pred_check
          %p1229 = pneg %p150
        $region46: #{tpu_custom_call.1} parent=39 // pred_check_branch
          %1231 = sbr.rel (%p1229) target = $region48
        $region47: #{tpu_custom_call.1} parent=39 // pred_region
          %s1233 = ssub.s32 128, 128
          %1234 = vsyncadd %s1225, %s1233
          %s1235 = smul.addr %s22, 128
          %s1236 = scalar_lea.hbm %s5, %s1235
          %s1238 = sshll.u32 %s1228, 4
          %s1239 = int_to_ptr.vmem [resolvable:$true] %s1238
          %1241 = dma.vmem_to_hbm [thread:$0]  %s1239, 128, %s1236, %s1225
        $region48: #{tpu_custom_call.1} parent=39 // pred_fallthru
          _
      $region40: #{tpu_custom_call.1} parent=5 // pred_fallthru
        _
      %p1242 = scmp.le.s32.totalorder 2, %s17
      // Predicated region
      $region49: #{tpu_custom_call.1} parent=5 // pred_check
        %p1243 = pneg %p1242
      $region50: #{tpu_custom_call.1} parent=5 // pred_check_branch
        %1245 = sbr.rel (%p1243) target = $region52
      $region51: #{tpu_custom_call.1} parent=5 // pred_region
        %s1246 = ssub.s32 %s17, 2
        // Predicated region
        $region53: #{tpu_custom_call.1} parent=51 // pred_check
          %p1247 = pneg %p156
        $region54: #{tpu_custom_call.1} parent=51 // pred_check_branch
          %1249 = sbr.rel (%p1247) target = $region56
        $region55: #{tpu_custom_call.1} parent=51 // pred_region
          %s1250 = sand.u32 %s141, 1
          %s1251 = scalar_lea.sflag [#allocation4], %s1250
          %s1252 = sand.u32 %s141, 1
          %s1253 = smul.addr %s1252, 8
          %s1254 = scalar_lea.vmem [#allocation5], %s1253
          %1255 = dma.done %s1251, 128
        $region56: #{tpu_custom_call.1} parent=51 // pred_fallthru
          _
      $region52: #{tpu_custom_call.1} parent=5 // pred_fallthru
        _
    $region6: #{tpu_custom_call.1} parent=1 // loop_footer
      %s21 = sadd.s32 1, %s17
    $region7: #{tpu_custom_call.1} parent=1 // loop_footer_branch
      %16 = sbr.rel target = $region3
    $region8: #{tpu_custom_call.1} parent=1 // loop_exit
      _
    %1256 = vsyncpa [#allocation3], 1
    %s1257 = scalar_lea.sflag [#allocation3], 1
    %1258 = vsyncpa %s1257, 1
    %1259 = vsyncpa [#allocation4], 1
    %s1260 = scalar_lea.sflag [#allocation4], 1
    %1261 = vsyncpa %s1260, 1

</llo_original>
